<compile_context>
chip_gen: v7x
topology: tpu7x:2x2x1
jax: 0.10.0
libtpu: 0.0.40
codegen_flags: <defaults>
</compile_context>

<pallas_src>
import functools

import jax
import jax.numpy as jnp
from jax.experimental import pallas as pl
from jax.experimental.pallas import tpu as pltpu

_LANES = 512            # lane-dense slab width (multiple of 128)
_DEF_TILE_ROWS = 1024   # 1024 x 512 x 4B = 2 MiB per f32 block (fits v7x VMEM)


def _dropout_kernel(x_ref, bits_ref, o_ref, *, threshold, scale):
    # keep with probability 1 - rate:  P(bits >= rate * 2^32) = 1 - rate
    keep = bits_ref[...] >= jnp.uint32(threshold)
    x = x_ref[...]
    scaled = x * jnp.asarray(scale, dtype=x.dtype)
    o_ref[...] = jnp.where(keep, scaled, jnp.zeros_like(scaled))


def dropout_block(x, *, rate, seed, training=True, max_tile_rows=_DEF_TILE_ROWS):
    """Forward pass of DropoutBlock(rate) on tensor x (any shape)."""
    if (not training) or rate == 0.0:
        return x
    if rate >= 1.0:
        return jnp.zeros_like(x)
    assert max_tile_rows % 8 == 0 and max_tile_rows > 0

    orig_shape, dtype = x.shape, x.dtype
    total = x.size
    lanes = _LANES

    rows = pl.cdiv(total, lanes)
    if rows <= max_tile_rows:
        tile_r = rows                         # single block == full array dims
    else:
        tile_r = max_tile_rows                # multiple of 8 -> (8,128) aligned
        rows = pl.cdiv(rows, tile_r) * tile_r

    padded_total = rows * lanes
    flat = x.reshape(-1)
    if padded_total != total:
        flat = jnp.pad(flat, (0, padded_total - total))
    x2d = flat.reshape(rows, lanes)

    # i.i.d. uint32 random bits, one per element (same tiling as x2d).
    bits = jax.random.bits(jax.random.PRNGKey(seed), (rows, lanes), jnp.uint32)

    threshold = min(int(round(rate * 4294967296.0)), 4294967295)
    scale = float(1.0 / (1.0 - rate))
    kernel = functools.partial(_dropout_kernel, threshold=threshold, scale=scale)

    grid = (rows // tile_r,)
    out2d = pl.pallas_call(
        kernel,
        out_shape=jax.ShapeDtypeStruct((rows, lanes), dtype),
        grid=grid,
        in_specs=[
            pl.BlockSpec((tile_r, lanes), lambda i: (i, 0)),
            pl.BlockSpec((tile_r, lanes), lambda i: (i, 0)),
        ],
        out_specs=pl.BlockSpec((tile_r, lanes), lambda i: (i, 0)),
        compiler_params=pltpu.CompilerParams(
            dimension_semantics=("parallel",),   # independent tiles -> megacore
        ),
    )(x2d, bits)

    return out2d.reshape(-1)[:total].reshape(orig_shape)


if __name__ == "__main__":
    key = jax.random.PRNGKey(0)
    # NCHW input, small shapes: batch=2, channels=4, spatial=16.
    x = jax.random.normal(key, (2, 4, 16, 16), dtype=jnp.float32)

    dropout_rate = 0.5
    y = dropout_block(x, rate=dropout_rate, seed=0, training=True)
    y = jax.block_until_ready(y)

    # Sanity checks on dropout semantics.
    assert y.shape == x.shape and y.dtype == x.dtype
    scale = 1.0 / (1.0 - dropout_rate)
    mask = y != 0.0
    ok_vals = jnp.allclose(jnp.where(mask, y, x * scale), x * scale, rtol=1e-6)
    keep_frac = float(jnp.mean(mask.astype(jnp.float32)))
    assert bool(ok_vals), "surviving elements are not scaled by 1/(1-p)"
    assert 0.3 < keep_frac < 0.7, f"keep fraction {keep_frac} far from 1-p"

    # Eval mode is identity.
    y_eval = jax.block_until_ready(
        dropout_block(x, rate=dropout_rate, seed=0, training=False))
    assert bool(jnp.array_equal(y_eval, x))

    # Exercise the multi-tile + padding path (flat size not a multiple of 512,
    # small row tile forces a >1 grid).
    x2 = jax.random.normal(jax.random.PRNGKey(1), (3, 5, 33, 33), dtype=jnp.float32)
    p2 = 0.25
    y2 = jax.block_until_ready(
        dropout_block(x2, rate=p2, seed=7, training=True, max_tile_rows=8))
    assert y2.shape == x2.shape and y2.dtype == x2.dtype
    s2 = 1.0 / (1.0 - p2)
    m2 = y2 != 0.0
    assert bool(jnp.allclose(jnp.where(m2, y2, x2 * s2), x2 * s2, rtol=1e-6))
    kf2 = float(jnp.mean(m2.astype(jnp.float32)))
    assert 0.6 < kf2 < 0.9, f"keep fraction {kf2} far from 1-p"

    print("KERNEL_OK")
</pallas_src>

<mosaic_0001>
module attributes {stable_mosaic.version = 11 : i64} {
  func.func @_dropout_kernel(%arg0: i32, %arg1: memref<4x512xf32, #tpu.memory_space<vmem>>, %arg2: memref<4x512xi32, #tpu.memory_space<vmem>>, %arg3: memref<4x512xf32, #tpu.memory_space<vmem>>) attributes {dimension_semantics = [#tpu.dimension_semantics<parallel>], iteration_bounds = array<i64: 1>, scalar_prefetch = 0 : i64, scratch_operands = 0 : i64, tpu.core_type = #tpu.core_type<tc>, window_params = [{transform_indices = @transform_0, window_bounds = array<i64: 4, 512>}, {transform_indices = @transform_1, window_bounds = array<i64: 4, 512>}, {transform_indices = @transform_2, window_bounds = array<i64: 4, 512>}]} {
    %c0 = arith.constant 0 : index
    %c0_0 = arith.constant 0 : index
    %0 = vector.load %arg2[%c0, %c0_0] : memref<4x512xi32, #tpu.memory_space<vmem>>, vector<4x512xi32>
    %c-2147483648_i32 = arith.constant -2147483648 : i32
    %1 = vector.broadcast %c-2147483648_i32 : i32 to vector<4x512xi32>
    %2 = arith.cmpi uge, %0, %1 : vector<4x512xi32>
    %c0_1 = arith.constant 0 : index
    %c0_2 = arith.constant 0 : index
    %3 = vector.load %arg1[%c0_1, %c0_2] : memref<4x512xf32, #tpu.memory_space<vmem>>, vector<4x512xf32>
    %cst = arith.constant 2.000000e+00 : f32
    %4 = vector.broadcast %cst : f32 to vector<4x512xf32>
    %5 = arith.mulf %3, %4 : vector<4x512xf32>
    %cst_3 = arith.constant 0.000000e+00 : f32
    %6 = vector.broadcast %cst_3 : f32 to vector<4x512xf32>
    %7 = arith.select %2, %5, %6 : vector<4x512xi1>, vector<4x512xf32>
    %c0_4 = arith.constant 0 : index
    %c0_5 = arith.constant 0 : index
    %8 = vector.load %arg3[%c0_4, %c0_5] : memref<4x512xf32, #tpu.memory_space<vmem>>, vector<4x512xf32>
    tpu.vector_store %arg3[%c0_4, %c0_5], %7 {strides = array<i32>} : memref<4x512xf32, #tpu.memory_space<vmem>>, vector<4x512xf32>,
    return
  }
  func.func @transform_0(%arg0: i32) -> (i32, i32) {
    %c0_i32 = arith.constant 0 : i32
    %c0_i32_0 = arith.constant 0 : i32
    return %arg0, %c0_i32 : i32, i32
  }
  func.func @transform_1(%arg0: i32) -> (i32, i32) {
    %c0_i32 = arith.constant 0 : i32
    %c0_i32_0 = arith.constant 0 : i32
    return %arg0, %c0_i32 : i32, i32
  }
  func.func @transform_2(%arg0: i32) -> (i32, i32) {
    %c0_i32 = arith.constant 0 : i32
    %c0_i32_0 = arith.constant 0 : i32
    return %arg0, %c0_i32 : i32, i32
  }
}

</mosaic_0001>

<llo_original>
// kernel: tpu_custom_call.1
$region0: #{tpu_custom_call.1}
  #allocation0 [shape = 'u32[]', space=smem, size = 0x4, offset = 0x4, fixed_abs, tag = 'smem constant byte address 0x4 - core index']
  #allocation1 [shape = 'u32[144,128]{1,0:T(1,128)}', space=vmem, size = 0x12000, scoped, tag = 'internal scratch']
  %s0 = inlined_call_operand.hbm [shape: f32[4,512], index: 0, kind: input, shape index: {}]
  %s1 = inlined_call_operand.hbm [shape: u32[4,512], index: 1, kind: input, shape index: {}]
  %s2 = inlined_call_operand.hbm [shape: f32[4,512], index: 2, kind: output, shape index: {}]
  %s3 = sld [smem:[#allocation0]]
  $region26: #{tpu_custom_call.1} parent=0
    _
  %s5 = ssub.s32 1, %s3
  %s6 = scalar_select 0, %s5, %s3
  $region1: #{tpu_custom_call.1} parent=0
    #allocation2 [shape = 'u8[8192]{0}', space=vmem, size = 0x2000, scoped, tag = 'input window, operand 0, single buffered']
    #allocation3 [shape = 's32[1]{0}', space=sflag, size = 0x4, scoped, tag = 'scoped memory for tpu_custom_call.1']
    #allocation4 [shape = 's32[1]{0}', space=sflag, size = 0x4, scoped, tag = 'scoped memory for tpu_custom_call.1']
    #allocation5 [shape = 'u8[8192]{0}', space=vmem, size = 0x2000, scoped, tag = 'input window, operand 1, single buffered']
    #allocation6 [shape = 's32[1]{0}', space=sflag, size = 0x4, scoped, tag = 'scoped memory for tpu_custom_call.1']
    #allocation7 [shape = 'u8[8192]{0}', space=vmem, size = 0x2000, scoped, tag = 'output window, operand 0, single buffered']
    %7 = vsyncpa [#allocation3], 0
    %8 = vsyncpa [#allocation6], 0
    %9 = vsyncpa [#allocation4], 0
    // Predicated region
    $region2: #{tpu_custom_call.1} parent=1 // pred_check
      _
    $region3: #{tpu_custom_call.1} parent=1 // pred_check_branch
      %11 = sbr.rel (0) target = $region5
    $region4: #{tpu_custom_call.1} parent=1 // pred_region
      %s13 = ssub.s32 256, 256
      %14 = vsyncadd [#allocation3], %s13
      %s16 = sshll.u32 [#allocation2], 4
      %s17 = int_to_ptr.vmem [resolvable:$true] %s16
      %19 = dma.hbm_to_vmem [thread:$0]  %s0, 256, %s17, [#allocation3]
    $region5: #{tpu_custom_call.1} parent=1 // pred_fallthru
      _
    // Predicated region
    $region6: #{tpu_custom_call.1} parent=1 // pred_check
      _
    $region7: #{tpu_custom_call.1} parent=1 // pred_check_branch
      %21 = sbr.rel (0) target = $region9
    $region8: #{tpu_custom_call.1} parent=1 // pred_region
      %s23 = ssub.s32 256, 256
      %24 = vsyncadd [#allocation6], %s23
      %s26 = sshll.u32 [#allocation5], 4
      %s27 = int_to_ptr.vmem [resolvable:$true] %s26
      %29 = dma.hbm_to_vmem [thread:$0]  %s1, 256, %s27, [#allocation6]
    $region9: #{tpu_custom_call.1} parent=1 // pred_fallthru
      _
    // Predicated region
    $region10: #{tpu_custom_call.1} parent=1 // pred_check
      _
    $region11: #{tpu_custom_call.1} parent=1 // pred_check_branch
      %31 = sbr.rel (0) target = $region13
    $region12: #{tpu_custom_call.1} parent=1 // pred_region
      %32 = dma.done [#allocation3], 256
    $region13: #{tpu_custom_call.1} parent=1 // pred_fallthru
      _
    // Predicated region
    $region14: #{tpu_custom_call.1} parent=1 // pred_check
      _
    $region15: #{tpu_custom_call.1} parent=1 // pred_check_branch
      %34 = sbr.rel (0) target = $region17
    $region16: #{tpu_custom_call.1} parent=1 // pred_region
      %35 = dma.done [#allocation6], 256
    $region17: #{tpu_custom_call.1} parent=1 // pred_fallthru
      _
    %v36 = vld [vmem:[#allocation5] sm:$0xff]
    %v37 = vld [vmem:[#allocation5 + $0x8] sm:$0xff]
    %vm38 = vcmp.ge.u32.totalorder %v36, 2147483648
    %vm39 = vcmp.ge.u32.totalorder %v37, 2147483648
    %v40 = vld [vmem:[#allocation2] sm:$0xff]
    %v41 = vld [vmem:[#allocation2 + $0x8] sm:$0xff]
    %v42 = vmul.f32 %v40, 2.0
    %v43 = vmul.f32 %v41, 2.0
    %v44 = vsel %vm38, %v42, 0.0
    %v45 = vsel %vm39, %v43, 0.0
    %46 = vst [vmem:[#allocation7] sm:$0xff] %v44
    %47 = vst [vmem:[#allocation7 + $0x8] sm:$0xff] %v45
    // Predicated region
    $region18: #{tpu_custom_call.1} parent=1 // pred_check
      _
    $region19: #{tpu_custom_call.1} parent=1 // pred_check_branch
      %49 = sbr.rel (0) target = $region21
    $region20: #{tpu_custom_call.1} parent=1 // pred_region
      %s51 = ssub.s32 256, 256
      %52 = vsyncadd [#allocation4], %s51
      %s54 = sshll.u32 [#allocation7], 4
      %s55 = int_to_ptr.vmem [resolvable:$true] %s54
      %57 = dma.vmem_to_hbm [thread:$0]  %s55, 256, %s2, [#allocation4]
    $region21: #{tpu_custom_call.1} parent=1 // pred_fallthru
      _
    // Predicated region
    $region22: #{tpu_custom_call.1} parent=1 // pred_check
      _
    $region23: #{tpu_custom_call.1} parent=1 // pred_check_branch
      %59 = sbr.rel (0) target = $region25
    $region24: #{tpu_custom_call.1} parent=1 // pred_region
      %60 = dma.done [#allocation4], 256
    $region25: #{tpu_custom_call.1} parent=1 // pred_fallthru
      _
    %61 = vsyncpa [#allocation3], 1
    %62 = vsyncpa [#allocation6], 1
    %63 = vsyncpa [#allocation4], 1

</llo_original>
